<compile_context>
chip_gen: v7x
topology: tpu7x:2x2x1
jax: 0.10.0
libtpu: 0.0.40
codegen_flags: <defaults>
</compile_context>

<pallas_src>
import functools

import jax
import jax.numpy as jnp
from jax.experimental import pallas as pl
from jax.experimental.pallas import tpu as pltpu


def _round_up(x: int, m: int) -> int:
    return ((x + m - 1) // m) * m


# ---------------------------------------------------------------------------
# Kernels
# ---------------------------------------------------------------------------

def _kernel_single_k(x_ref, w_ref, b_ref, o_ref):
    # Whole K fits in one tile: one MXU dot, bias once, lane-dense store.
    acc = jnp.dot(x_ref[...], w_ref[...], preferred_element_type=jnp.float32)
    o_ref[...] = (acc + b_ref[...]).astype(o_ref.dtype)


def _kernel_acc_inplace(x_ref, w_ref, b_ref, o_ref):
    # f32 output block stays resident across the (arbitrary) K axis, so we can
    # accumulate directly into it — no scratch, no epilogue copy.  Bias is
    # added exactly once by seeding the accumulator with it at k == 0.
    k = pl.program_id(2)

    @pl.when(k == 0)
    def _():
        o_ref[...] = jnp.broadcast_to(b_ref[...], o_ref.shape)

    o_ref[...] += jnp.dot(x_ref[...], w_ref[...],
                          preferred_element_type=jnp.float32)


def _kernel_acc_scratch(x_ref, w_ref, b_ref, o_ref, acc_ref):
    # Non-f32 output: accumulate in an f32 VMEM scratch, cast in the epilogue.
    k = pl.program_id(2)

    @pl.when(k == 0)
    def _():
        acc_ref[...] = jnp.zeros_like(acc_ref)

    acc_ref[...] += jnp.dot(x_ref[...], w_ref[...],
                            preferred_element_type=jnp.float32)

    @pl.when(k == pl.num_programs(2) - 1)
    def _():
        o_ref[...] = (acc_ref[...] + b_ref[...]).astype(o_ref.dtype)


# ---------------------------------------------------------------------------
# Tile selection
# ---------------------------------------------------------------------------

_VMEM_TILE_BUDGET = 40 * 1024 * 1024   # double-buffered working-set cap (v7x-safe)
_TM_MAX = 512


def _choose_nk_tiles(in_features: int, out_features: int,
                     in_bytes: int, out_bytes: int):
    """(tn, tk) chosen once at init — the stored weight is padded to these."""
    in128 = _round_up(in_features, 128)
    out128 = _round_up(out_features, 128)
    tn = min(512, out128)
    tk = min(2048, in128)

    # v7x has 2 TensorCores: in the GEMV regime the M axis has a single block,
    # so make sure the "parallel" N axis has >= 2 blocks when possible.
    if out128 >= 256 and _round_up(out128, tn) // tn < 2:
        tn = max(128, _round_up(out128 // 2, 128))

    # Shrink K (then N) until the worst-case (tm = _TM_MAX) double-buffered
    # working set fits the budget.
    def working_set(tn_, tk_):
        return (2 * (_TM_MAX * tk_ + tk_ * tn_ + tn_) * in_bytes
                + 2 * _TM_MAX * tn_ * out_bytes
                + _TM_MAX * tn_ * 4)

    while working_set(tn, tk) > _VMEM_TILE_BUDGET and tk > 256:
        tk = max(256, _round_up(tk // 2, 128))
    while working_set(tn, tk) > _VMEM_TILE_BUDGET and tn > 256:
        tn = max(256, _round_up(tn // 2, 128))
    return tn, tk


def _choose_m_tile(batch: int, in_bytes: int) -> int:
    sub = 8 if in_bytes >= 4 else 16           # sublane multiple per dtype
    if batch <= 256:
        return _round_up(batch, sub)           # GEMV-like: whole batch resident
    if batch >= _TM_MAX:
        return _TM_MAX                         # 256-multiples fill the 256-wide MXU
    return 256


# ---------------------------------------------------------------------------
# Jitted forward (weight is already K-major + padded; only x is (maybe) padded)
# ---------------------------------------------------------------------------

@functools.partial(jax.jit, static_argnames=("out_features", "tm", "tn", "tk"))
def _linear_fwd(x, w_t, bias2d, *, out_features, tm, tn, tk):
    B, IN = x.shape
    INp, OUTp = w_t.shape
    out_dtype = x.dtype

    if x.dtype != w_t.dtype:                   # optional bf16 compute path
        x = x.astype(w_t.dtype)

    Bp = _round_up(B, tm)
    if Bp != B or INp != IN:                   # pad only when actually needed
        x = jnp.pad(x, ((0, Bp - B), (0, INp - IN)))

    m_blocks, n_blocks, k_blocks = Bp // tm, OUTp // tn, INp // tk

    in_bytes = jnp.dtype(w_t.dtype).itemsize
    out_bytes = jnp.dtype(out_dtype).itemsize
    cost = pl.CostEstimate(
        flops=2 * Bp * INp * OUTp,
        transcendentals=0,
        bytes_accessed=(Bp * INp * in_bytes + INp * OUTp * in_bytes
                        + OUTp * 4 + Bp * OUTp * out_bytes),
    )

    needed = (2 * (tm * tk + tk * tn) * in_bytes + 2 * tn * 4
              + 2 * tm * tn * out_bytes + tm * tn * 4)
    vmem_limit = int(min(48 * 2**20, max(32 * 2**20, needed * 5 // 4)))

    if k_blocks == 1:
        # K fits in one tile: simple kernel, 2-D parallel grid, no scratch.
        out_p = pl.pallas_call(
            _kernel_single_k,
            out_shape=jax.ShapeDtypeStruct((Bp, OUTp), out_dtype),
            grid_spec=pltpu.PrefetchScalarGridSpec(
                num_scalar_prefetch=0,
                grid=(m_blocks, n_blocks),
                in_specs=[
                    pl.BlockSpec((tm, tk), lambda i, j: (i, 0)),   # x
                    pl.BlockSpec((tk, tn), lambda i, j: (0, j)),   # W (K-major)
                    pl.BlockSpec((1, tn), lambda i, j: (0, j)),    # bias
                ],
                out_specs=pl.BlockSpec((tm, tn), lambda i, j: (i, j)),
            ),
            compiler_params=pltpu.CompilerParams(
                dimension_semantics=("parallel", "parallel"),
                vmem_limit_bytes=vmem_limit,
            ),
            cost_estimate=cost,
        )(x, w_t, bias2d)
    else:
        in_specs = [
            pl.BlockSpec((tm, tk), lambda i, j, k: (i, k)),        # x
            pl.BlockSpec((tk, tn), lambda i, j, k: (k, j)),        # W (K-major)
            pl.BlockSpec((1, tn), lambda i, j, k: (0, j)),         # bias
        ]
        out_specs = pl.BlockSpec((tm, tn), lambda i, j, k: (i, j))
        if out_dtype == jnp.float32:
            kernel, scratch = _kernel_acc_inplace, []
        else:
            kernel, scratch = _kernel_acc_scratch, [pltpu.VMEM((tm, tn), jnp.float32)]
        out_p = pl.pallas_call(
            kernel,
            out_shape=jax.ShapeDtypeStruct((Bp, OUTp), out_dtype),
            grid_spec=pltpu.PrefetchScalarGridSpec(
                num_scalar_prefetch=0,
                grid=(m_blocks, n_blocks, k_blocks),
                in_specs=in_specs,
                out_specs=out_specs,
                scratch_shapes=scratch,
            ),
            compiler_params=pltpu.CompilerParams(
                dimension_semantics=("parallel", "parallel", "arbitrary"),
                vmem_limit_bytes=vmem_limit,
            ),
            cost_estimate=cost,
        )(x, w_t, bias2d)

    if Bp != B or OUTp != out_features:        # slice only when actually padded
        out_p = out_p[:B, :out_features]
    return out_p


# ---------------------------------------------------------------------------
# Module: mirrors PyTorch `Linear` (nn.Linear forward), Pallas-backed.
# ---------------------------------------------------------------------------

class LinearPallas:
    """y = x @ W^T + b with W stored K-major (IN, OUT) and pre-padded once."""

    def __init__(self, in_features, out_features, *, key,
                 param_dtype=jnp.float32, compute_dtype=None,
                 tile_n=None, tile_k=None):
        self.in_features = int(in_features)
        self.out_features = int(out_features)
        self.param_dtype = param_dtype
        self.compute_dtype = param_dtype if compute_dtype is None else compute_dtype

        kw, kb = jax.random.split(key)
        bound = 1.0 / (in_features ** 0.5)     # nn.Linear default init
        weight = jax.random.uniform(kw, (out_features, in_features),
                                    minval=-bound, maxval=bound,
                                    dtype=jnp.float32)
        bias = jax.random.uniform(kb, (out_features,),
                                  minval=-bound, maxval=bound,
                                  dtype=jnp.float32)
        self._set_params(weight, bias, tile_n=tile_n, tile_k=tile_k)

    def _set_params(self, weight, bias, *, tile_n=None, tile_k=None):
        """weight: (OUT, IN) PyTorch layout. Done ONCE, outside the forward."""
        IN, OUT = self.in_features, self.out_features
        in_bytes = jnp.dtype(self.compute_dtype).itemsize
        out_bytes = jnp.dtype(self.param_dtype).itemsize
        tn, tk = _choose_nk_tiles(IN, OUT, in_bytes, out_bytes)
        if tile_n is not None:
            tn = int(tile_n)
        if tile_k is not None:
            tk = int(tile_k)
        self.tn, self.tk = tn, tk

        INp, OUTp = _round_up(IN, tk), _round_up(OUT, tn)
        w_t = jnp.asarray(weight, jnp.float32).T                      # (IN, OUT)
        w_t = jnp.pad(w_t, ((0, INp - IN), (0, OUTp - OUT)))
        self.w_t = jax.device_put(w_t.astype(self.compute_dtype))     # (INp, OUTp)
        b_p = jnp.pad(jnp.asarray(bias, jnp.float32), (0, OUTp - OUT))
        self.b = jax.device_put(b_p.reshape(1, OUTp))                 # (1, OUTp) f32

    def __call__(self, x):
        tm = _choose_m_tile(x.shape[0], jnp.dtype(self.compute_dtype).itemsize)
        return _linear_fwd(x, self.w_t, self.b,
                           out_features=self.out_features,
                           tm=tm, tn=self.tn, tk=self.tk)


# ---------------------------------------------------------------------------
# Demo / correctness check
# ---------------------------------------------------------------------------

if __name__ == "__main__":
    # Shapes consistent with Linear(in_features=32, out_features=64).
    batch, in_features, out_features = 8, 32, 64

    key = jax.random.PRNGKey(0)
    kx, kparams = jax.random.split(key)
    x = jax.random.normal(kx, (batch, in_features), dtype=jnp.float32)

    layer = LinearPallas(in_features, out_features, key=kparams)
    out = layer(x)
    jax.block_until_ready(out)

    # Reference (recover the un-padded PyTorch-layout params from the module).
    w = layer.w_t[:in_features, :out_features].T.astype(jnp.float32)  # (OUT, IN)
    b = layer.b[0, :out_features]
    ref = jnp.dot(x, w.T, precision=jax.lax.Precision.HIGHEST) + b
    assert out.shape == (batch, out_features)
    assert out.dtype == x.dtype
    assert jnp.allclose(out, ref, atol=1e-5, rtol=1e-5), (
        float(jnp.max(jnp.abs(out - ref))))

    # Also exercise the multi-K accumulate path (force tk < IN).
    layer2 = LinearPallas(256, 128, key=jax.random.PRNGKey(1), tile_k=128)
    x2 = jax.random.normal(jax.random.PRNGKey(2), (16, 256), dtype=jnp.float32)
    out2 = layer2(x2)
    jax.block_until_ready(out2)
    w2 = layer2.w_t[:256, :128].T.astype(jnp.float32)
    b2 = layer2.b[0, :128]
    ref2 = jnp.dot(x2, w2.T, precision=jax.lax.Precision.HIGHEST) + b2
    assert out2.shape == (16, 128)
    assert jnp.allclose(out2, ref2, atol=1e-5, rtol=1e-5), (
        float(jnp.max(jnp.abs(out2 - ref2))))

    print("KERNEL_OK")
</pallas_src>

<mosaic_0001>
module attributes {stable_mosaic.version = 11 : i64} {
  func.func @_kernel_single_k(%arg0: i32, %arg1: i32, %arg2: memref<8x128xf32, #tpu.memory_space<vmem>>, %arg3: memref<128x128xf32, #tpu.memory_space<vmem>>, %arg4: memref<1x128xf32, #tpu.memory_space<vmem>>, %arg5: memref<8x128xf32, #tpu.memory_space<vmem>>) attributes {dimension_semantics = [#tpu.dimension_semantics<parallel>, #tpu.dimension_semantics<parallel>], iteration_bounds = array<i64: 1, 1>, scalar_prefetch = 0 : i64, scratch_operands = 0 : i64, tpu.core_type = #tpu.core_type<tc>, window_params = [{transform_indices = @transform_0, window_bounds = array<i64: 8, 128>}, {transform_indices = @transform_1, window_bounds = array<i64: 128, 128>}, {transform_indices = @transform_2, window_bounds = array<i64: 1, 128>}, {transform_indices = @transform_3, window_bounds = array<i64: 8, 128>}]} {
    %c0 = arith.constant 0 : index
    %c0_0 = arith.constant 0 : index
    %0 = vector.load %arg2[%c0, %c0_0] : memref<8x128xf32, #tpu.memory_space<vmem>>, vector<8x128xf32>
    %c0_1 = arith.constant 0 : index
    %c0_2 = arith.constant 0 : index
    %1 = vector.load %arg3[%c0_1, %c0_2] : memref<128x128xf32, #tpu.memory_space<vmem>>, vector<128x128xf32>
    %cst = arith.constant dense<0.000000e+00> : vector<8x128xf32>
    %2 = tpu.matmul %0, %1, %cst {dimension_numbers = #tpu.dot_dimension_numbers<[1], [0], [0], [1], [0, 0, 1, 1], [], []>} : vector<8x128xf32>, vector<128x128xf32>, vector<8x128xf32> -> vector<8x128xf32>
    %c0_3 = arith.constant 0 : index
    %c0_4 = arith.constant 0 : index
    %3 = vector.load %arg4[%c0_3, %c0_4] : memref<1x128xf32, #tpu.memory_space<vmem>>, vector<1x128xf32>
    %4 = vector.broadcast %3 : vector<1x128xf32> to vector<8x128xf32>
    %5 = arith.addf %2, %4 : vector<8x128xf32>
    %c0_5 = arith.constant 0 : index
    %c0_6 = arith.constant 0 : index
    %6 = vector.load %arg5[%c0_5, %c0_6] : memref<8x128xf32, #tpu.memory_space<vmem>>, vector<8x128xf32>
    tpu.vector_store %arg5[%c0_5, %c0_6], %5 {strides = array<i32>} : memref<8x128xf32, #tpu.memory_space<vmem>>, vector<8x128xf32>,
    return
  }
  func.func @transform_0(%arg0: i32, %arg1: i32) -> (i32, i32) {
    %c0_i32 = arith.constant 0 : i32
    %c0_i32_0 = arith.constant 0 : i32
    return %arg0, %c0_i32 : i32, i32
  }
  func.func @transform_1(%arg0: i32, %arg1: i32) -> (i32, i32) {
    %c0_i32 = arith.constant 0 : i32
    %c0_i32_0 = arith.constant 0 : i32
    return %c0_i32, %arg1 : i32, i32
  }
  func.func @transform_2(%arg0: i32, %arg1: i32) -> (i32, i32) {
    %c0_i32 = arith.constant 0 : i32
    %c0_i32_0 = arith.constant 0 : i32
    return %c0_i32, %arg1 : i32, i32
  }
  func.func @transform_3(%arg0: i32, %arg1: i32) -> (i32, i32) {
    %c0_i32 = arith.constant 0 : i32
    return %arg0, %arg1 : i32, i32
  }
}

</mosaic_0001>

<llo_original>
// kernel: _linear_fwd.1
$region0: #{_linear_fwd.1}
  #allocation0 [shape = 'u32[]', space=smem, size = 0x4, offset = 0x4, fixed_abs, tag = 'smem constant byte address 0x4 - core index']
  #allocation1 [shape = 'u32[144,128]{1,0:T(1,128)}', space=vmem, size = 0x12000, scoped, tag = 'internal scratch']
  %s0 = inlined_call_operand.vmem [shape: f32[8,128], index: 0, kind: input, shape index: {}]
  %s1 = inlined_call_operand.hbm [shape: f32[128,128], index: 1, kind: input, shape index: {}]
  %s2 = inlined_call_operand.vmem [shape: f32[1,128], index: 2, kind: input, shape index: {}]
  %s3 = inlined_call_operand.hbm [shape: f32[8,128], index: 3, kind: output, shape index: {}]
  %s4 = sld [smem:[#allocation0]]
  $region26: #{_linear_fwd.1} parent=0
    _
  %s6 = ssub.s32 1, %s4
  %s7 = scalar_select 0, %s6, %s4
  $region1: #{_linear_fwd.1} parent=0
    #allocation2 [shape = 'u8[65536]{0}', space=vmem, size = 0x10000, scoped, tag = 'input window, operand 1, single buffered']
    #allocation3 [shape = 's32[1]{0}', space=sflag, size = 0x4, scoped, tag = 'scoped memory for _linear_fwd.1']
    #allocation4 [shape = 's32[1]{0}', space=sflag, size = 0x4, scoped, tag = 'scoped memory for _linear_fwd.1']
    #allocation5 [shape = 'u8[4096]{0}', space=vmem, size = 0x1000, scoped, tag = 'output window, operand 0, single buffered']
    %8 = vsyncpa [#allocation3], 0
    %9 = vsyncpa [#allocation4], 0
    // Predicated region
    $region2: #{_linear_fwd.1} parent=1 // pred_check
      _
    $region3: #{_linear_fwd.1} parent=1 // pred_check_branch
      %11 = sbr.rel (0) target = $region5
    $region4: #{_linear_fwd.1} parent=1 // pred_region
      _
    $region5: #{_linear_fwd.1} parent=1 // pred_fallthru
      _
    // Predicated region
    $region6: #{_linear_fwd.1} parent=1 // pred_check
      _
    $region7: #{_linear_fwd.1} parent=1 // pred_check_branch
      %13 = sbr.rel (0) target = $region9
    $region8: #{_linear_fwd.1} parent=1 // pred_region
      %s15 = ssub.s32 2048, 2048
      %16 = vsyncadd [#allocation3], %s15
      %s17 = sshll.u32 [#allocation2], 4
      %s18 = int_to_ptr.vmem [resolvable:$true] %s17
      %23 = dma.hbm_to_vmem [thread:$0]  %s1, 2048, %s18, [#allocation3], 128, 128, 8
    $region9: #{_linear_fwd.1} parent=1 // pred_fallthru
      _
    // Predicated region
    $region10: #{_linear_fwd.1} parent=1 // pred_check
      _
    $region11: #{_linear_fwd.1} parent=1 // pred_check_branch
      %25 = sbr.rel (0) target = $region13
    $region12: #{_linear_fwd.1} parent=1 // pred_region
      _
    $region13: #{_linear_fwd.1} parent=1 // pred_fallthru
      _
    // Predicated region
    $region14: #{_linear_fwd.1} parent=1 // pred_check
      _
    $region15: #{_linear_fwd.1} parent=1 // pred_check_branch
      %27 = sbr.rel (0) target = $region17
    $region16: #{_linear_fwd.1} parent=1 // pred_region
      %28 = dma.done [#allocation3], 2048
    $region17: #{_linear_fwd.1} parent=1 // pred_fallthru
      _
    %v29 = vld [vmem:[%s0] sm:$0xff]
    %v30 = vld [vmem:[#allocation2] sm:$0xff]
    %v31 = vld [vmem:[#allocation2 + $0x8] sm:$0xff]
    %v32 = vld [vmem:[#allocation2 + $0x10] sm:$0xff]
    %v33 = vld [vmem:[#allocation2 + $0x18] sm:$0xff]
    %v34 = vld [vmem:[#allocation2 + $0x20] sm:$0xff]
    %v35 = vld [vmem:[#allocation2 + $0x28] sm:$0xff]
    %v36 = vld [vmem:[#allocation2 + $0x30] sm:$0xff]
    %v37 = vld [vmem:[#allocation2 + $0x38] sm:$0xff]
    %v38 = vld [vmem:[#allocation2 + $0x40] sm:$0xff]
    %v39 = vld [vmem:[#allocation2 + $0x48] sm:$0xff]
    %v40 = vld [vmem:[#allocation2 + $0x50] sm:$0xff]
    %v41 = vld [vmem:[#allocation2 + $0x58] sm:$0xff]
    %v42 = vld [vmem:[#allocation2 + $0x60] sm:$0xff]
    %v43 = vld [vmem:[#allocation2 + $0x68] sm:$0xff]
    %v44 = vld [vmem:[#allocation2 + $0x70] sm:$0xff]
    %v45 = vld [vmem:[#allocation2 + $0x78] sm:$0xff]
    %v46 = vld [vmem:[%s2] sm:$0x1]
    %v48 = vlaneseq
    %v49 = vshrl.u32 %v48, 7
    %v50 = vsub.s32 0, %v49
    %v51 = vrot.slane %v46, %v50
    %53 = vmatprep.subr.mxu0 0.0
    %54 = vmatpush1.msra.mxu0 %v30
    %55 = vmatprep.subr.mxu0 0.0
    %56 = vmatpush1.msra.mxu0 %v31
    %57 = vmatprep.subr.mxu0 0.0
    %58 = vmatpush1.msra.mxu0 %v32
    %59 = vmatprep.subr.mxu0 0.0
    %60 = vmatpush1.msra.mxu0 %v33
    %61 = vmatprep.subr.mxu0 0.0
    %62 = vmatpush1.msra.mxu0 %v34
    %63 = vmatprep.subr.mxu0 0.0
    %64 = vmatpush1.msra.mxu0 %v35
    %65 = vmatprep.subr.mxu0 0.0
    %66 = vmatpush1.msra.mxu0 %v36
    %67 = vmatprep.subr.mxu0 0.0
    %68 = vmatpush1.msra.mxu0 %v37
    %69 = vmatprep.subr.mxu0 0.0
    %70 = vmatpush1.msra.mxu0 %v38
    %71 = vmatprep.subr.mxu0 0.0
    %72 = vmatpush1.msra.mxu0 %v39
    %73 = vmatprep.subr.mxu0 0.0
    %74 = vmatpush1.msra.mxu0 %v40
    %75 = vmatprep.subr.mxu0 0.0
    %76 = vmatpush1.msra.mxu0 %v41
    %77 = vmatprep.subr.mxu0 0.0
    %78 = vmatpush1.msra.mxu0 %v42
    %79 = vmatprep.subr.mxu0 0.0
    %80 = vmatpush1.msra.mxu0 %v43
    %81 = vmatprep.subr.mxu0 0.0
    %82 = vmatpush1.msra.mxu0 %v44
    %83 = vmatprep.subr.mxu0 0.0
    %84 = vmatpush1.msra.mxu0 %v45
    %85 = vmatprep.subr.mxu0 0.0
    %86 = vmatpush1.msra.mxu0 0.0
    %87 = vmatprep.subr.mxu0 0.0
    %88 = vmatpush1.msra.mxu0 0.0
    %89 = vmatprep.subr.mxu0 0.0
    %90 = vmatpush1.msra.mxu0 0.0
    %91 = vmatprep.subr.mxu0 0.0
    %92 = vmatpush1.msra.mxu0 0.0
    %93 = vmatprep.subr.mxu0 0.0
    %94 = vmatpush1.msra.mxu0 0.0
    %95 = vmatprep.subr.mxu0 0.0
    %96 = vmatpush1.msra.mxu0 0.0
    %97 = vmatprep.subr.mxu0 0.0
    %98 = vmatpush1.msra.mxu0 0.0
    %99 = vmatprep.subr.mxu0 0.0
    %100 = vmatpush1.msra.mxu0 0.0
    %101 = vmatprep.subr.mxu0 0.0
    %102 = vmatpush1.msra.mxu0 0.0
    %103 = vmatprep.subr.mxu0 0.0
    %104 = vmatpush1.msra.mxu0 0.0
    %105 = vmatprep.subr.mxu0 0.0
    %106 = vmatpush1.msra.mxu0 0.0
    %107 = vmatprep.subr.mxu0 0.0
    %108 = vmatpush1.msra.mxu0 0.0
    %109 = vmatprep.subr.mxu0 0.0
    %110 = vmatpush1.msra.mxu0 0.0
    %111 = vmatprep.subr.mxu0 0.0
    %112 = vmatpush1.msra.mxu0 0.0
    %113 = vmatprep.subr.mxu0 0.0
    %114 = vmatpush1.msra.mxu0 0.0
    %115 = vmatprep.subr.mxu0 0.0
    %116 = vmatpush1.msra.mxu0 0.0
    %117 = vmatprep.mubr.f32.mxu0 0.0
    %118 = vmatmul.mubr.f32.gmra.mrb[0].mxu0 %v29
    %v119 = vpop.f32.mrb[0].mxu0
    %v120 = vadd.f32 %v51, %v119
    %v121 = vpop.f32.mrb[0].mxu0
    %122 = vdwg.mxu0
    %123 = vst [vmem:[#allocation5] sm:$0xff] %v120
    // Predicated region
    $region18: #{_linear_fwd.1} parent=1 // pred_check
      _
    $region19: #{_linear_fwd.1} parent=1 // pred_check_branch
      %125 = sbr.rel (0) target = $region21
    $region20: #{_linear_fwd.1} parent=1 // pred_region
      %s127 = ssub.s32 128, 128
      %128 = vsyncadd [#allocation4], %s127
      %s130 = sshll.u32 [#allocation5], 4
      %s131 = int_to_ptr.vmem [resolvable:$true] %s130
      %133 = dma.vmem_to_hbm [thread:$0]  %s131, 128, %s3, [#allocation4]
    $region21: #{_linear_fwd.1} parent=1 // pred_fallthru
      _
    // Predicated region
    $region22: #{_linear_fwd.1} parent=1 // pred_check
      _
    $region23: #{_linear_fwd.1} parent=1 // pred_check_branch
      %135 = sbr.rel (0) target = $region25
    $region24: #{_linear_fwd.1} parent=1 // pred_region
      %136 = dma.done [#allocation4], 128
    $region25: #{_linear_fwd.1} parent=1 // pred_fallthru
      _
    %137 = vsyncpa [#allocation3], 1
    %138 = vsyncpa [#allocation4], 1

</llo_original>
